<compile_context>
chip_gen: v6e
topology: v6e:2x2x1
jax: 0.10.0
libtpu: 0.0.40
codegen_flags: <defaults>
</compile_context>

<pallas_src>
import functools

import jax
import jax.numpy as jnp
from jax.experimental import pallas as pl
from jax.experimental.pallas import tpu as pltpu


def _round_up(x, m):
    return ((x + m - 1) // m) * m


def _pick_tile(n_pad, preferred):
    """Largest 128-multiple <= preferred that divides n_pad (n_pad % 128 == 0)."""
    t = min(_round_up(preferred, 128), n_pad)
    t = (t // 128) * 128
    while n_pad % t != 0:
        t -= 128
    return t


# --------------------------------------------------- phase 1: Hn = dinv * (X @ W)  (bf16)
def _xw_kernel(x_ref, w_ref, dinv_ref, hn_ref):
    h = jnp.dot(x_ref[...], w_ref[...], preferred_element_type=jnp.float32)
    hn_ref[...] = (dinv_ref[...] * h).astype(hn_ref.dtype)


# ------------------------------------------ phase 2: out = dinv * (A_hat @ Hn) + b  (f32)
def _agg_kernel(adj_ref, hn_ref, dinv_ref, b_ref, out_ref, *, tk, hn_resident):
    k = pl.program_id(1)

    @pl.when(k == 0)
    def _():
        out_ref[...] = jnp.zeros_like(out_ref)

    if hn_resident:
        # Whole Hn lives in VMEM; take the (tk, c_pad) slice for this k step.
        start = pl.multiple_of(k * tk, 128)
        hn = hn_ref[pl.ds(start, tk), :]
    else:
        hn = hn_ref[...]

    # bf16 x bf16 MXU matmul, f32 accumulate directly into the resident output block.
    out_ref[...] += jnp.dot(adj_ref[...], hn, preferred_element_type=jnp.float32)

    @pl.when(k == pl.num_programs(1) - 1)
    def _():
        out_ref[...] = dinv_ref[...] * out_ref[...] + b_ref[...]


def linear_encoder_forward(x, edge_index, weight, bias):
    """GCNConv forward. x: [N, Cin], edge_index: [2, E] int32,
    weight: [Cin, Cout] (transpose of PyG's lin.weight), bias: [Cout]."""
    n, c_in = x.shape
    c_out = weight.shape[1]
    f32 = jnp.float32
    bf16 = jnp.bfloat16

    # ---- tiling / padding ---------------------------------------------------------
    c_pad = _round_up(c_out, 128)      # lane-dense output (unmasked vst)
    n_pad = _round_up(n, 128)          # decoupled from tile sizes (no quadratic blowup)

    tm = _pick_tile(n_pad, 512)        # output row tile
    if n_pad // tm < 2 and tm > 128:   # keep >= 2 row tiles for the v7x dual-TC split
        tm = _pick_tile(n_pad, tm // 2)
    tk = _pick_tile(n_pad, 1024)       # reduction tile over adjacency columns

    src, dst = edge_index[0], edge_index[1]
    keep = src != dst                  # drop existing self-loops

    # ---- glue: dense A_hat built directly in bf16 (exact for 0/1/small counts) ----
    adj = jnp.zeros((n_pad, n_pad), dtype=bf16)
    adj = adj.at[dst, src].add(keep.astype(bf16))                  # A[dst, src] += 1
    diag = jnp.arange(n)
    adj = adj.at[diag, diag].add(jnp.ones((n,), bf16))             # add self-loops

    # ---- glue: dinv from edge_index (in-degree incl. self-loop) ----
    deg = jnp.zeros((n,), f32).at[dst].add(keep.astype(f32)) + 1.0
    dinv = jnp.where(deg > 0.0, jax.lax.rsqrt(deg), 0.0)
    dinv_pad = jnp.zeros((n_pad, 1), f32).at[:n, 0].set(dinv)

    x_pad = jnp.zeros((n_pad, c_in), f32).at[:n, :].set(x.astype(f32))
    w_pad = jnp.zeros((c_in, c_pad), f32).at[:, :c_out].set(weight.astype(f32))
    b_pad = jnp.zeros((1, c_pad), f32).at[0, :c_out].set(bias.astype(f32))

    # ---- VMEM budgeting (48 MiB cap -> safe on v7x's 64 MiB and v5e/v6e's 128 MiB) --
    adj_db = 2 * tm * tk * 2                       # double-buffered bf16 adj tile
    out_db = 2 * tm * c_pad * 4                    # double-buffered f32 out block
    hn_full = n_pad * c_pad * 2                    # whole bf16 Hn
    hn_stream = 2 * tk * c_pad * 2                 # double-buffered bf16 Hn slice
    slack = 2 << 20
    budget = 48 << 20
    hn_resident = (hn_full + adj_db + out_db + slack) <= budget
    hn_bytes = hn_full if hn_resident else hn_stream
    vmem_limit = int(min(budget,
                         max(32 << 20, 2 * (adj_db + out_db + hn_bytes + slack))))

    # ---- phase 1: Hn = dinv * (X @ W), row-tiled, lane-dense, emitted as bf16 ------
    hn = pl.pallas_call(
        _xw_kernel,
        grid=(n_pad // tm,),
        out_shape=jax.ShapeDtypeStruct((n_pad, c_pad), bf16),
        in_specs=[
            pl.BlockSpec((tm, c_in), lambda i: (i, 0)),
            pl.BlockSpec((c_in, c_pad), lambda i: (0, 0)),
            pl.BlockSpec((tm, 1), lambda i: (i, 0)),
        ],
        out_specs=pl.BlockSpec((tm, c_pad), lambda i: (i, 0)),
        compiler_params=pltpu.CompilerParams(
            dimension_semantics=("parallel",)),
    )(x_pad, w_pad, dinv_pad)

    # ---- phase 2: out = dinv * (A_hat @ Hn) + b, K-accumulated into the out block ---
    if hn_resident:
        hn_spec = pl.BlockSpec((n_pad, c_pad), lambda i, k: (0, 0))   # DMAed once
    else:
        hn_spec = pl.BlockSpec((tk, c_pad), lambda i, k: (k, 0))      # streamed

    agg = functools.partial(_agg_kernel, tk=tk, hn_resident=hn_resident)
    out_pad = pl.pallas_call(
        agg,
        grid=(n_pad // tm, n_pad // tk),
        out_shape=jax.ShapeDtypeStruct((n_pad, c_pad), f32),
        in_specs=[
            pl.BlockSpec((tm, tk), lambda i, k: (i, k)),       # adj tile (bf16)
            hn_spec,                                           # Hn (bf16)
            pl.BlockSpec((tm, 1), lambda i, k: (i, 0)),        # dinv row tile (f32)
            pl.BlockSpec((1, c_pad), lambda i, k: (0, 0)),     # bias (grid-invariant)
        ],
        out_specs=pl.BlockSpec((tm, c_pad), lambda i, k: (i, 0)),
        compiler_params=pltpu.CompilerParams(
            dimension_semantics=("parallel", "arbitrary"),
            vmem_limit_bytes=vmem_limit),
    )(adj, hn, dinv_pad, b_pad)

    return out_pad[:n, :c_out]


def _reference(x, edge_index, weight, bias):
    """Pure-JAX f32 GCNConv reference for verification."""
    n = x.shape[0]
    src, dst = edge_index[0], edge_index[1]
    keep = (src != dst).astype(jnp.float32)
    adj = jnp.zeros((n, n), jnp.float32).at[dst, src].add(keep) + jnp.eye(n)
    deg = adj.sum(-1)
    dinv = jnp.where(deg > 0, deg ** -0.5, 0.0)
    a_norm = dinv[:, None] * adj * dinv[None, :]
    return a_norm @ (x @ weight) + bias[None, :]


if __name__ == "__main__":
    N, C_IN, C_OUT, E = 16, 8, 32, 48

    key = jax.random.PRNGKey(0)
    k_x, k_src, k_off, k_w, k_b = jax.random.split(key, 5)

    # Node features [N, C_in]
    x = jax.random.normal(k_x, (N, C_IN), dtype=jnp.float32)

    # Random directed edge list [2, E] (no self-loops in the raw list)
    src = jax.random.randint(k_src, (E,), 0, N, dtype=jnp.int32)
    off = jax.random.randint(k_off, (E,), 1, N, dtype=jnp.int32)
    dst = (src + off) % N
    edge_index = jnp.stack([src, dst], axis=0)

    # GCNConv parameters: PyG lin.weight is [out, in]; we store the transpose.
    w_t = jax.random.normal(k_w, (C_OUT, C_IN), dtype=jnp.float32) * (
        (2.0 / (C_IN + C_OUT)) ** 0.5)
    weight = w_t.T                                 # [C_in, C_out]
    bias = jnp.zeros((C_OUT,), dtype=jnp.float32)  # PyG initializes bias to zeros

    out = linear_encoder_forward(x, edge_index, weight, bias)
    out = jax.block_until_ready(out)

    ref = _reference(x, edge_index, weight, bias)
    assert out.shape == (N, C_OUT)
    # bf16 Hn / bf16 adjacency on the MXU (f32 accumulate) -> bf16-level tolerance.
    assert jnp.allclose(out, ref, atol=2e-2, rtol=2e-2), "mismatch vs reference"

    print("KERNEL_OK")
</pallas_src>

<mosaic_0001>
module attributes {stable_mosaic.version = 11 : i64} {
  func.func @_xw_kernel(%arg0: i32, %arg1: memref<128x8xf32, #tpu.memory_space<vmem>>, %arg2: memref<8x128xf32, #tpu.memory_space<vmem>>, %arg3: memref<128x1xf32, #tpu.memory_space<vmem>>, %arg4: memref<128x128xbf16, #tpu.memory_space<vmem>>) attributes {dimension_semantics = [#tpu.dimension_semantics<parallel>], iteration_bounds = array<i64: 1>, scalar_prefetch = 0 : i64, scratch_operands = 0 : i64, tpu.core_type = #tpu.core_type<tc>, window_params = [{transform_indices = @transform_0, window_bounds = array<i64: 128, 8>}, {pipeline_mode = #tpu.pipeline_mode<synchronous>, transform_indices = @transform_1, window_bounds = array<i64: 8, 128>}, {transform_indices = @transform_2, window_bounds = array<i64: 128, 1>}, {transform_indices = @transform_3, window_bounds = array<i64: 128, 128>}]} {
    %c0 = arith.constant 0 : index
    %c0_0 = arith.constant 0 : index
    %0 = vector.load %arg1[%c0, %c0_0] : memref<128x8xf32, #tpu.memory_space<vmem>>, vector<128x8xf32>
    %c0_1 = arith.constant 0 : index
    %c0_2 = arith.constant 0 : index
    %1 = vector.load %arg2[%c0_1, %c0_2] : memref<8x128xf32, #tpu.memory_space<vmem>>, vector<8x128xf32>
    %cst = arith.constant dense<0.000000e+00> : vector<128x128xf32>
    %2 = tpu.matmul %0, %1, %cst {dimension_numbers = #tpu.dot_dimension_numbers<[1], [0], [0], [1], [0, 0, 1, 1], [], []>} : vector<128x8xf32>, vector<8x128xf32>, vector<128x128xf32> -> vector<128x128xf32>
    %c0_3 = arith.constant 0 : index
    %c0_4 = arith.constant 0 : index
    %3 = vector.load %arg3[%c0_3, %c0_4] : memref<128x1xf32, #tpu.memory_space<vmem>>, vector<128x1xf32>
    %4 = vector.broadcast %3 : vector<128x1xf32> to vector<128x128xf32>
    %5 = arith.mulf %4, %2 : vector<128x128xf32>
    %6 = arith.truncf %5 : vector<128x128xf32> to vector<128x128xbf16>
    %c0_5 = arith.constant 0 : index
    %c0_6 = arith.constant 0 : index
    %7 = vector.load %arg4[%c0_5, %c0_6] : memref<128x128xbf16, #tpu.memory_space<vmem>>, vector<128x128xbf16>
    tpu.vector_store %arg4[%c0_5, %c0_6], %6 {strides = array<i32>} : memref<128x128xbf16, #tpu.memory_space<vmem>>, vector<128x128xbf16>,
    return
  }
  func.func @transform_0(%arg0: i32) -> (i32, i32) {
    %c0_i32 = arith.constant 0 : i32
    %c0_i32_0 = arith.constant 0 : i32
    return %arg0, %c0_i32 : i32, i32
  }
  func.func @transform_1(%arg0: i32) -> (i32, i32) {
    %c0_i32 = arith.constant 0 : i32
    %c0_i32_0 = arith.constant 0 : i32
    %c0_i32_1 = arith.constant 0 : i32
    return %c0_i32, %c0_i32_0 : i32, i32
  }
  func.func @transform_2(%arg0: i32) -> (i32, i32) {
    %c0_i32 = arith.constant 0 : i32
    %c0_i32_0 = arith.constant 0 : i32
    return %arg0, %c0_i32 : i32, i32
  }
  func.func @transform_3(%arg0: i32) -> (i32, i32) {
    %c0_i32 = arith.constant 0 : i32
    %c0_i32_0 = arith.constant 0 : i32
    return %arg0, %c0_i32 : i32, i32
  }
}

</mosaic_0001>

<llo_original>
// kernel: tpu_custom_call.1
$region0: #{tpu_custom_call.1}
  #allocation0 [shape = 'u32[]', space=smem, size = 0x4, offset = 0x4, fixed_abs, tag = 'smem constant byte address 0x4 - core index']
  #allocation1 [shape = 'u32[144,128]{1,0:T(1,128)}', space=vmem, size = 0x12000, scoped, tag = 'internal scratch']
  %s0 = inlined_call_operand.vmem [shape: f32[128,8], index: 0, kind: input, shape index: {}]
  %s1 = inlined_call_operand.vmem [shape: f32[8,128], index: 1, kind: input, shape index: {}]
  %s2 = inlined_call_operand.vmem [shape: f32[128,1], index: 2, kind: input, shape index: {}]
  %s3 = inlined_call_operand.hbm [shape: bf16[128,128], index: 3, kind: output, shape index: {}]
  %s4 = sld [smem:[#allocation0]]
  $region22: #{tpu_custom_call.1} parent=0
    _
  %s6 = ssub.s32 1, %s4
  %s7 = scalar_select 0, %s6, %s4
  $region1: #{tpu_custom_call.1} parent=0
    #allocation2 [shape = 'u8[32768]{0}', space=vmem, size = 0x8000, scoped, tag = 'output window, operand 0, single buffered']
    #allocation3 [shape = 's32[1]{0}', space=sflag, size = 0x4, scoped, tag = 'scoped memory for tpu_custom_call.1']
    %8 = vsyncpa [#allocation3], 0
    // Predicated region
    $region2: #{tpu_custom_call.1} parent=1 // pred_check
      _
    $region3: #{tpu_custom_call.1} parent=1 // pred_check_branch
      %10 = sbr.rel (0) target = $region5
    $region4: #{tpu_custom_call.1} parent=1 // pred_region
      _
    $region5: #{tpu_custom_call.1} parent=1 // pred_fallthru
      _
    // Predicated region
    $region6: #{tpu_custom_call.1} parent=1 // pred_check
      _
    $region7: #{tpu_custom_call.1} parent=1 // pred_check_branch
      %12 = sbr.rel (0) target = $region9
    $region8: #{tpu_custom_call.1} parent=1 // pred_region
      _
    $region9: #{tpu_custom_call.1} parent=1 // pred_fallthru
      _
    // Predicated region
    $region10: #{tpu_custom_call.1} parent=1 // pred_check
      _
    $region11: #{tpu_custom_call.1} parent=1 // pred_check_branch
      %14 = sbr.rel (0) target = $region13
    $region12: #{tpu_custom_call.1} parent=1 // pred_region
      _
    $region13: #{tpu_custom_call.1} parent=1 // pred_fallthru
      _
    %v15 = vld [vmem:[%s0] sm:$0xff]
    %v16 = vld [vmem:[%s0 + $0x8] sm:$0xff]
    %v17 = vld [vmem:[%s0 + $0x10] sm:$0xff]
    %v18 = vld [vmem:[%s0 + $0x18] sm:$0xff]
    %v19 = vld [vmem:[%s0 + $0x20] sm:$0xff]
    %v20 = vld [vmem:[%s0 + $0x28] sm:$0xff]
    %v21 = vld [vmem:[%s0 + $0x30] sm:$0xff]
    %v22 = vld [vmem:[%s0 + $0x38] sm:$0xff]
    %v23 = vld [vmem:[%s0 + $0x40] sm:$0xff]
    %v24 = vld [vmem:[%s0 + $0x48] sm:$0xff]
    %v25 = vld [vmem:[%s0 + $0x50] sm:$0xff]
    %v26 = vld [vmem:[%s0 + $0x58] sm:$0xff]
    %v27 = vld [vmem:[%s0 + $0x60] sm:$0xff]
    %v28 = vld [vmem:[%s0 + $0x68] sm:$0xff]
    %v29 = vld [vmem:[%s0 + $0x70] sm:$0xff]
    %v30 = vld [vmem:[%s0 + $0x78] sm:$0xff]
    %v31 = vld [vmem:[%s1] sm:$0xff]
    %vm32 = vcmask 64512
    %v34 = vsel %vm32, %v15, 0
    %v37 = vsel %vm32, %v16, 0
    %v40 = vsel %vm32, %v17, 0
    %v43 = vsel %vm32, %v18, 0
    %v46 = vsel %vm32, %v19, 0
    %v49 = vsel %vm32, %v20, 0
    %v52 = vsel %vm32, %v21, 0
    %v55 = vsel %vm32, %v22, 0
    %v58 = vsel %vm32, %v23, 0
    %v61 = vsel %vm32, %v24, 0
    %v64 = vsel %vm32, %v25, 0
    %v67 = vsel %vm32, %v26, 0
    %v70 = vsel %vm32, %v27, 0
    %v73 = vsel %vm32, %v28, 0
    %v76 = vsel %vm32, %v29, 0
    %v79 = vsel %vm32, %v30, 0
    %81 = vmatprep.subr.mxu0 0.0
    %82 = vmatpush1.msra.mxu0 0.0
    %83 = vmatprep.subr.mxu0 0.0
    %84 = vmatpush1.msra.mxu0 0.0
    %85 = vmatprep.subr.mxu0 0.0
    %86 = vmatpush1.msra.mxu0 0.0
    %87 = vmatprep.subr.mxu0 0.0
    %88 = vmatpush1.msra.mxu0 0.0
    %89 = vmatprep.subr.mxu0 0.0
    %90 = vmatpush1.msra.mxu0 0.0
    %91 = vmatprep.subr.mxu0 0.0
    %92 = vmatpush1.msra.mxu0 0.0
    %93 = vmatprep.subr.mxu0 0.0
    %94 = vmatpush1.msra.mxu0 0.0
    %95 = vmatprep.subr.mxu0 0.0
    %96 = vmatpush1.msra.mxu0 0.0
    %97 = vmatprep.subr.mxu0 0.0
    %98 = vmatpush1.msra.mxu0 0.0
    %99 = vmatprep.subr.mxu0 0.0
    %100 = vmatpush1.msra.mxu0 0.0
    %101 = vmatprep.subr.mxu0 0.0
    %102 = vmatpush1.msra.mxu0 0.0
    %103 = vmatprep.subr.mxu0 0.0
    %104 = vmatpush1.msra.mxu0 0.0
    %105 = vmatprep.subr.mxu0 0.0
    %106 = vmatpush1.msra.mxu0 0.0
    %107 = vmatprep.subr.mxu0 0.0
    %108 = vmatpush1.msra.mxu0 0.0
    %109 = vmatprep.subr.mxu0 0.0
    %110 = vmatpush1.msra.mxu0 0.0
    %111 = vmatprep.subr.mxu0 0.0
    %112 = vmatpush1.msra.mxu0 %v31
    %113 = vmatprep.subr.mxu0 0.0
    %114 = vmatpush2.msra.mxu0 0.0
    %115 = vmatprep.subr.mxu0 0.0
    %116 = vmatpush2.msra.mxu0 0.0
    %117 = vmatprep.subr.mxu0 0.0
    %118 = vmatpush2.msra.mxu0 0.0
    %119 = vmatprep.subr.mxu0 0.0
    %120 = vmatpush2.msra.mxu0 0.0
    %121 = vmatprep.subr.mxu0 0.0
    %122 = vmatpush2.msra.mxu0 0.0
    %123 = vmatprep.subr.mxu0 0.0
    %124 = vmatpush2.msra.mxu0 0.0
    %125 = vmatprep.subr.mxu0 0.0
    %126 = vmatpush2.msra.mxu0 0.0
    %127 = vmatprep.subr.mxu0 0.0
    %128 = vmatpush2.msra.mxu0 0.0
    %129 = vmatprep.subr.mxu0 0.0
    %130 = vmatpush2.msra.mxu0 0.0
    %131 = vmatprep.subr.mxu0 0.0
    %132 = vmatpush2.msra.mxu0 0.0
    %133 = vmatprep.subr.mxu0 0.0
    %134 = vmatpush2.msra.mxu0 0.0
    %135 = vmatprep.subr.mxu0 0.0
    %136 = vmatpush2.msra.mxu0 0.0
    %137 = vmatprep.subr.mxu0 0.0
    %138 = vmatpush2.msra.mxu0 0.0
    %139 = vmatprep.subr.mxu0 0.0
    %140 = vmatpush2.msra.mxu0 0.0
    %141 = vmatprep.subr.mxu0 0.0
    %142 = vmatpush2.msra.mxu0 0.0
    %143 = vmatprep.subr.mxu0 0.0
    %144 = vmatpush2.msra.mxu0 0.0
    %145 = vmatprep.mubr.f32.mxu0 0.0
    %146 = vmatmul.mubr.f32.gmra.mxu0 %v34
    %v147 = vpop.f32.mrf.mxu0
    %v148 = vadd.f32 0.0, %v147
    %v149 = vpop.f32.mrf.mxu0
    %150 = vmatprep.mubr.f32.mxu0 0.0
    %151 = vmatmul.mubr.f32.gmra.mxu0 %v37
    %v152 = vpop.f32.mrf.mxu0
    %v153 = vadd.f32 0.0, %v152
    %v154 = vpop.f32.mrf.mxu0
    %155 = vmatprep.mubr.f32.mxu0 0.0
    %156 = vmatmul.mubr.f32.gmra.mxu0 %v40
    %v157 = vpop.f32.mrf.mxu0
    %v158 = vadd.f32 0.0, %v157
    %v159 = vpop.f32.mrf.mxu0
    %160 = vmatprep.mubr.f32.mxu0 0.0
    %161 = vmatmul.mubr.f32.gmra.mxu0 %v43
    %v162 = vpop.f32.mrf.mxu0
    %v163 = vadd.f32 0.0, %v162
    %v164 = vpop.f32.mrf.mxu0
    %165 = vmatprep.mubr.f32.mxu0 0.0
    %166 = vmatmul.mubr.f32.gmra.mxu0 %v46
    %v167 = vpop.f32.mrf.mxu0
    %v168 = vadd.f32 0.0, %v167
    %v169 = vpop.f32.mrf.mxu0
    %170 = vmatprep.mubr.f32.mxu0 0.0
    %171 = vmatmul.mubr.f32.gmra.mxu0 %v49
    %v172 = vpop.f32.mrf.mxu0
    %v173 = vadd.f32 0.0, %v172
    %v174 = vpop.f32.mrf.mxu0
    %175 = vmatprep.mubr.f32.mxu0 0.0
    %176 = vmatmul.mubr.f32.gmra.mxu0 %v52
    %v177 = vpop.f32.mrf.mxu0
    %v178 = vadd.f32 0.0, %v177
    %v179 = vpop.f32.mrf.mxu0
    %180 = vmatprep.mubr.f32.mxu0 0.0
    %181 = vmatmul.mubr.f32.gmra.mxu0 %v55
    %v182 = vpop.f32.mrf.mxu0
    %v183 = vadd.f32 0.0, %v182
    %v184 = vpop.f32.mrf.mxu0
    %185 = vmatprep.mubr.f32.mxu0 0.0
    %186 = vmatmul.mubr.f32.gmra.mxu0 %v58
    %v187 = vpop.f32.mrf.mxu0
    %v188 = vadd.f32 0.0, %v187
    %v189 = vpop.f32.mrf.mxu0
    %190 = vmatprep.mubr.f32.mxu0 0.0
    %191 = vmatmul.mubr.f32.gmra.mxu0 %v61
    %v192 = vpop.f32.mrf.mxu0
    %v193 = vadd.f32 0.0, %v192
    %v194 = vpop.f32.mrf.mxu0
    %195 = vmatprep.mubr.f32.mxu0 0.0
    %196 = vmatmul.mubr.f32.gmra.mxu0 %v64
    %v197 = vpop.f32.mrf.mxu0
    %v198 = vadd.f32 0.0, %v197
    %v199 = vpop.f32.mrf.mxu0
    %200 = vmatprep.mubr.f32.mxu0 0.0
    %201 = vmatmul.mubr.f32.gmra.mxu0 %v67
    %v202 = vpop.f32.mrf.mxu0
    %v203 = vadd.f32 0.0, %v202
    %v204 = vpop.f32.mrf.mxu0
    %205 = vmatprep.mubr.f32.mxu0 0.0
    %206 = vmatmul.mubr.f32.gmra.mxu0 %v70
    %v207 = vpop.f32.mrf.mxu0
    %v208 = vadd.f32 0.0, %v207
    %v209 = vpop.f32.mrf.mxu0
    %210 = vmatprep.mubr.f32.mxu0 0.0
    %211 = vmatmul.mubr.f32.gmra.mxu0 %v73
    %v212 = vpop.f32.mrf.mxu0
    %v213 = vadd.f32 0.0, %v212
    %v214 = vpop.f32.mrf.mxu0
    %215 = vmatprep.mubr.f32.mxu0 0.0
    %216 = vmatmul.mubr.f32.gmra.mxu0 %v76
    %v217 = vpop.f32.mrf.mxu0
    %v218 = vadd.f32 0.0, %v217
    %v219 = vpop.f32.mrf.mxu0
    %220 = vmatprep.mubr.f32.mxu0 0.0
    %221 = vmatmul.mubr.f32.gmra.mxu0 %v79
    %v222 = vpop.f32.mrf.mxu0
    %v223 = vadd.f32 0.0, %v222
    %v224 = vpop.f32.mrf.mxu0
    %225 = vdwg.mxu0
    %v226 = vld [vmem:[%s2] sm:$0xff]
    %v227 = vld [vmem:[%s2 + $0x8] sm:$0xff]
    %v228 = vld [vmem:[%s2 + $0x10] sm:$0xff]
    %v229 = vld [vmem:[%s2 + $0x18] sm:$0xff]
    %v230 = vld [vmem:[%s2 + $0x20] sm:$0xff]
    %v231 = vld [vmem:[%s2 + $0x28] sm:$0xff]
    %v232 = vld [vmem:[%s2 + $0x30] sm:$0xff]
    %v233 = vld [vmem:[%s2 + $0x38] sm:$0xff]
    %v234 = vld [vmem:[%s2 + $0x40] sm:$0xff]
    %v235 = vld [vmem:[%s2 + $0x48] sm:$0xff]
    %v236 = vld [vmem:[%s2 + $0x50] sm:$0xff]
    %v237 = vld [vmem:[%s2 + $0x58] sm:$0xff]
    %v238 = vld [vmem:[%s2 + $0x60] sm:$0xff]
    %v239 = vld [vmem:[%s2 + $0x68] sm:$0xff]
    %v240 = vld [vmem:[%s2 + $0x70] sm:$0xff]
    %v241 = vld [vmem:[%s2 + $0x78] sm:$0xff]
    %243 = vset.pattern.permute.xlu0 0
    %244 = vperm.xlu0 %243, %v226
    %v245 = vpop.permute.xlu0 %244
    %248 = vset.pattern.permute.xlu0 0
    %249 = vperm.xlu0 %248, %v227
    %v250 = vpop.permute.xlu0 %249
    %253 = vset.pattern.permute.xlu0 0
    %254 = vperm.xlu0 %253, %v228
    %v255 = vpop.permute.xlu0 %254
    %258 = vset.pattern.permute.xlu0 0
    %259 = vperm.xlu0 %258, %v229
    %v260 = vpop.permute.xlu0 %259
    %263 = vset.pattern.permute.xlu0 0
    %264 = vperm.xlu0 %263, %v230
    %v265 = vpop.permute.xlu0 %264
    %268 = vset.pattern.permute.xlu0 0
    %269 = vperm.xlu0 %268, %v231
    %v270 = vpop.permute.xlu0 %269
    %273 = vset.pattern.permute.xlu0 0
    %274 = vperm.xlu0 %273, %v232
    %v275 = vpop.permute.xlu0 %274
    %278 = vset.pattern.permute.xlu0 0
    %279 = vperm.xlu0 %278, %v233
    %v280 = vpop.permute.xlu0 %279
    %283 = vset.pattern.permute.xlu0 0
    %284 = vperm.xlu0 %283, %v234
    %v285 = vpop.permute.xlu0 %284
    %288 = vset.pattern.permute.xlu0 0
    %289 = vperm.xlu0 %288, %v235
    %v290 = vpop.permute.xlu0 %289
    %293 = vset.pattern.permute.xlu0 0
    %294 = vperm.xlu0 %293, %v236
    %v295 = vpop.permute.xlu0 %294
    %298 = vset.pattern.permute.xlu0 0
    %299 = vperm.xlu0 %298, %v237
    %v300 = vpop.permute.xlu0 %299
    %303 = vset.pattern.permute.xlu0 0
    %304 = vperm.xlu0 %303, %v238
    %v305 = vpop.permute.xlu0 %304
    %308 = vset.pattern.permute.xlu0 0
    %309 = vperm.xlu0 %308, %v239
    %v310 = vpop.permute.xlu0 %309
    %313 = vset.pattern.permute.xlu0 0
    %314 = vperm.xlu0 %313, %v240
    %v315 = vpop.permute.xlu0 %314
    %318 = vset.pattern.permute.xlu0 0
    %319 = vperm.xlu0 %318, %v241
    %v320 = vpop.permute.xlu0 %319
    %v322 = vmul.f32 %v245, %v148
    %v323 = vmul.f32 %v250, %v153
    %v324 = vmul.f32 %v255, %v158
    %v325 = vmul.f32 %v260, %v163
    %v326 = vmul.f32 %v265, %v168
    %v327 = vmul.f32 %v270, %v173
    %v328 = vmul.f32 %v275, %v178
    %v329 = vmul.f32 %v280, %v183
    %v330 = vmul.f32 %v285, %v188
    %v331 = vmul.f32 %v290, %v193
    %v332 = vmul.f32 %v295, %v198
    %v333 = vmul.f32 %v300, %v203
    %v334 = vmul.f32 %v305, %v208
    %v335 = vmul.f32 %v310, %v213
    %v336 = vmul.f32 %v315, %v218
    %v337 = vmul.f32 %v320, %v223
    %v338 = vpack.c.bf16 %v323, %v322
    %v339 = vpack.c.bf16 %v325, %v324
    %v340 = vpack.c.bf16 %v327, %v326
    %v341 = vpack.c.bf16 %v329, %v328
    %v342 = vpack.c.bf16 %v331, %v330
    %v343 = vpack.c.bf16 %v333, %v332
    %v344 = vpack.c.bf16 %v335, %v334
    %v345 = vpack.c.bf16 %v337, %v336
    %v354 = vunpack.c.l.b16 %v338
    %v355 = vunpack.c.h.b16 %v338
    %v356 = vunpack.c.l.b16 %v339
    %v357 = vunpack.c.h.b16 %v339
    %v358 = vunpack.c.l.b16 %v340
    %v359 = vunpack.c.h.b16 %v340
    %v360 = vunpack.c.l.b16 %v341
    %v361 = vunpack.c.h.b16 %v341
    %v362 = vunpack.c.l.b16 %v342
    %v363 = vunpack.c.h.b16 %v342
    %v364 = vunpack.c.l.b16 %v343
    %v365 = vunpack.c.h.b16 %v343
    %v366 = vunpack.c.l.b16 %v344
    %v367 = vunpack.c.h.b16 %v344
    %v368 = vunpack.c.l.b16 %v345
    %v369 = vunpack.c.h.b16 %v345
    %v370 = vpack.c.b16 %v354, %v354
    %v371 = vpack.c.b16 %v355, %v355
    %v372 = vpack.c.b16 %v356, %v356
    %v373 = vpack.c.b16 %v357, %v357
    %v374 = vpack.c.b16 %v358, %v358
    %v375 = vpack.c.b16 %v359, %v359
    %v376 = vpack.c.b16 %v360, %v360
    %v377 = vpack.c.b16 %v361, %v361
    %v378 = vpack.c.b16 %v362, %v362
    %v379 = vpack.c.b16 %v363, %v363
    %v380 = vpack.c.b16 %v364, %v364
    %v381 = vpack.c.b16 %v365, %v365
    %v382 = vpack.c.b16 %v366, %v366
    %v383 = vpack.c.b16 %v367, %v367
    %v384 = vpack.c.b16 %v368, %v368
    %v385 = vpack.c.b16 %v369, %v369
    %402 = vst [vmem:[#allocation2] sm:$0xf] %v370
    %403 = vst [vmem:[#allocation2 + $0x4] sm:$0xf] %v371
    %404 = vst [vmem:[#allocation2 + $0x8] sm:$0xf] %v372
    %405 = vst [vmem:[#allocation2 + $0xc] sm:$0xf] %v373
    %406 = vst [vmem:[#allocation2 + $0x10] sm:$0xf] %v374
    %407 = vst [vmem:[#allocation2 + $0x14] sm:$0xf] %v375
    %408 = vst [vmem:[#allocation2 + $0x18] sm:$0xf] %v376
    %409 = vst [vmem:[#allocation2 + $0x1c] sm:$0xf] %v377
    %410 = vst [vmem:[#allocation2 + $0x20] sm:$0xf] %v378
    %411 = vst [vmem:[#allocation2 + $0x24] sm:$0xf] %v379
    %412 = vst [vmem:[#allocation2 + $0x28] sm:$0xf] %v380
    %413 = vst [vmem:[#allocation2 + $0x2c] sm:$0xf] %v381
    %414 = vst [vmem:[#allocation2 + $0x30] sm:$0xf] %v382
    %415 = vst [vmem:[#allocation2 + $0x34] sm:$0xf] %v383
    %416 = vst [vmem:[#allocation2 + $0x38] sm:$0xf] %v384
    %417 = vst [vmem:[#allocation2 + $0x3c] sm:$0xf] %v385
    // Predicated region
    $region14: #{tpu_custom_call.1} parent=1 // pred_check
      _
    $region15: #{tpu_custom_call.1} parent=1 // pred_check_branch
      %419 = sbr.rel (0) target = $region17
    $region16: #{tpu_custom_call.1} parent=1 // pred_region
      %s421 = ssub.s32 1024, 1024
      %422 = vsyncadd [#allocation3], %s421
      %s423 = sshll.u32 [#allocation2], 4
      %s424 = int_to_ptr.vmem [resolvable:$true] %s423
      %429 = dma.vmem_to_hbm [thread:$0]  %s424, 1024, %s3, [#allocation3], 64, 64, 4
    $region17: #{tpu_custom_call.1} parent=1 // pred_fallthru
      _
    // Predicated region
    $region18: #{tpu_custom_call.1} parent=1 // pred_check
      _
    $region19: #{tpu_custom_call.1} parent=1 // pred_check_branch
      %431 = sbr.rel (0) target = $region21
    $region20: #{tpu_custom_call.1} parent=1 // pred_region
      %432 = dma.done [#allocation3], 1024
    $region21: #{tpu_custom_call.1} parent=1 // pred_fallthru
      _
    %433 = vsyncpa [#allocation3], 1

</llo_original>
